<compile_context>
chip_gen: v7x
topology: tpu7x:2x2x1
jax: 0.10.0
libtpu: 0.0.40
codegen_flags: <defaults>
</compile_context>

<pallas_src>
import functools
import math

import jax
import jax.numpy as jnp
from jax import lax
from jax.experimental import pallas as pl
from jax.experimental.pallas import tpu as pltpu


# ----------------------------------------------------------------------------
# Kernel: one grid step == (one batch element, one query tile).
# ----------------------------------------------------------------------------
def _fused_attention_kernel(
    x_ref,       # (N, C)        full sequence of this batch element (compute dtype)
    wq_ref,      # (G, C, gw)    per-group q weight, scale folded (resident)
    bq_ref,      # (G, 1, gw)    per-group q bias, scale folded (f32)
    wkv_ref,     # (C, 2C)       k|v weight (resident)
    bkv_ref,     # (1, 2C)       k|v bias (f32)
    wp_ref,      # (G, gw, C)    per-group proj weight rows (resident)
    bp_ref,      # (1, C)        proj bias (f32)
    o_ref,       # (TQ, C)       output tile
    k_ref,       # (G, N, gw)    VMEM scratch: K per head group (compute dtype)
    v_ref,       # (G, N, gw)    VMEM scratch: V per head group (compute dtype)
    xq_ref,      # (TQ, C)       VMEM scratch: query-tile activations (compute dtype)
    acc_ref,     # (TQ, C)       VMEM scratch: f32 output accumulator
    *,
    num_heads: int,
    heads_per_group: int,
    mxu_dtype,
    approx_softmax: bool,
):
    qi = pl.program_id(1)
    n, c = x_ref.shape
    tq = o_ref.shape[0]
    hd = c // num_heads
    gw = heads_per_group * hd
    num_groups = num_heads // heads_per_group

    # ---- K/V projection for the whole sequence, once per batch element -------
    @pl.when(qi == 0)
    def _():
        kv = jnp.dot(x_ref[...].astype(mxu_dtype), wkv_ref[...],
                     preferred_element_type=jnp.float32) + bkv_ref[...]   # (N, 2C) f32
        kv = kv.astype(k_ref.dtype)
        for g in range(num_groups):                 # init-only static loop, lane-dense stores
            k_ref[g] = kv[:, g * gw:(g + 1) * gw]
            v_ref[g] = kv[:, c + g * gw:c + (g + 1) * gw]

    # ---- query-tile activations in the MXU operand dtype ---------------------
    row0 = pl.multiple_of(qi * tq, tq)
    xq_ref[...] = x_ref[pl.ds(row0, tq), :].astype(xq_ref.dtype)
    acc_ref[...] = jnp.zeros_like(acc_ref)

    # ---- per head-group attention + accumulated partial output projection ----
    # fori_loop (not an unrolled Python loop) bounds live ranges: only one
    # group's (TQ, N) scores / (TQ, gw) temporaries are alive at a time.
    def group_body(g, carry):
        # Q projection for this group; 1/sqrt(hd) already folded into wq/bq.
        q_grp = jnp.dot(xq_ref[...], wq_ref[g],
                        preferred_element_type=jnp.float32) + bq_ref[g]   # (TQ, gw) f32
        k_grp = k_ref[g]                                                  # (N, gw)
        v_grp = v_ref[g]                                                  # (N, gw)

        outs = []
        for i in range(heads_per_group):            # small static inner loop (<= 128//hd heads)
            q = q_grp[:, i * hd:(i + 1) * hd].astype(mxu_dtype)           # (TQ, hd)
            k = k_grp[:, i * hd:(i + 1) * hd]
            v = v_grp[:, i * hd:(i + 1) * hd]

            # scores = q @ k^T  (contract the head dim on the MXU)
            s = lax.dot_general(q, k, (((1,), (1,)), ((), ())),
                                preferred_element_type=jnp.float32)       # (TQ, N) f32

            # numerically-stable softmax, f32 on VPU/EUP
            s = s - jnp.max(s, axis=-1, keepdims=True)
            p = jnp.exp(s)
            denom = jnp.sum(p, axis=-1, keepdims=True)
            if approx_softmax:
                p = p * pl.reciprocal(denom, approx=True)                 # EUP slot, ~free
            else:
                p = p / denom                                             # exact (faithful path)

            outs.append(jnp.dot(p.astype(mxu_dtype), v,
                                preferred_element_type=jnp.float32))      # (TQ, hd) f32

        o_grp = outs[0] if heads_per_group == 1 else jnp.concatenate(outs, axis=-1)

        # Fold the output projection: out = sum_g o_g @ Wproj[rows of group g].
        acc_ref[...] += jnp.dot(o_grp.astype(mxu_dtype), wp_ref[g],
                                preferred_element_type=jnp.float32)
        return carry

    lax.fori_loop(0, num_groups, group_body, 0)

    # dropout p = 0.0 is the identity.
    o_ref[...] = (acc_ref[...] + bp_ref[...]).astype(o_ref.dtype)


# ----------------------------------------------------------------------------
# Host-side helpers
# ----------------------------------------------------------------------------
def _choose_query_tile(n, target=256):
    """Largest 8-aligned divisor of n that is <= target (or n itself)."""
    if n <= target:
        return n
    for t in range(target, 7, -1):
        if n % t == 0 and t % 8 == 0:
            return t
    # TODO(synk): pad N to a multiple of 8/target for awkward sequence lengths.
    return n


def _choose_heads_per_group(num_heads, head_dim):
    """Group heads so the group width is ~128 lanes (unmasked vector traffic)."""
    if head_dim >= 128:
        return 1
    hpg = min(num_heads, max(1, 128 // head_dim))
    while num_heads % hpg:
        hpg -= 1
    return hpg


def _default_vmem_limit():
    try:
        cap = int(pltpu.get_tpu_info().vmem_capacity_bytes)
    except Exception:
        cap = 64 * 1024 * 1024          # conservative (v7x per-TC VMEM)
    # Leave headroom: <=48 MiB on v7x (64 MiB physical), <=96 MiB on v5e/v6e.
    return max(32 * 1024 * 1024, min((cap * 3) // 4, 96 * 1024 * 1024))


# ----------------------------------------------------------------------------
# Wrapper
# ----------------------------------------------------------------------------
def pallas_custom_attention(x, params, num_heads, attn_bias=None,
                            mxu_dtype=jnp.bfloat16, approx_softmax=None):
    """x: (B, N, C). Returns (B, N, C) in x.dtype. Mirrors CustomAttention.forward."""
    # TODO(synk): attn_bias (xformers BlockDiagonalMask) is not plumbed in
    # (module default is None); guarded by the assert below.
    assert attn_bias is None, "attn_bias is not supported by this Pallas kernel"

    B, N, C = x.shape
    assert C % num_heads == 0
    hd = C // num_heads
    scale = 1.0 / math.sqrt(hd)                       # matches query.shape[-1] ** -0.5
    out_dtype = x.dtype
    if approx_softmax is None:
        approx_softmax = (mxu_dtype != jnp.float32)   # exact softmax on faithful f32 path

    hpg = _choose_heads_per_group(num_heads, hd)
    G = num_heads // hpg
    gw = hpg * hd
    tq = _choose_query_tile(N)
    nq = N // tq

    f32 = jnp.float32
    qkv_w, qkv_b = params["qkv_w"], params["qkv_b"]

    # Scale folded into the q projection; weights relaid out into per-group
    # slabs so the kernel only ever indexes the major axis dynamically.
    wq_g = (qkv_w[:, :C] * scale).astype(mxu_dtype).reshape(C, G, gw).transpose(1, 0, 2)
    bq_g = (qkv_b[:C] * scale).astype(f32).reshape(G, 1, gw)
    wkv = qkv_w[:, C:].astype(mxu_dtype)              # (C, 2C)
    bkv = qkv_b[C:].astype(f32).reshape(1, 2 * C)
    wp_g = params["proj_w"].astype(mxu_dtype).reshape(G, gw, C)
    bp = params["proj_b"].astype(f32).reshape(1, C)

    # Cast x once (halves HBM streaming on the bf16 path; no-op for f32).
    x_in = x.astype(mxu_dtype)

    kernel = functools.partial(
        _fused_attention_kernel,
        num_heads=num_heads, heads_per_group=hpg,
        mxu_dtype=mxu_dtype, approx_softmax=approx_softmax,
    )

    # TODO(synk): constant-index weight specs could be single-buffered
    # (pipeline_mode=pl.Buffered(1)) to shave resident VMEM on v7x.
    return pl.pallas_call(
        kernel,
        out_shape=jax.ShapeDtypeStruct((B, N, C), out_dtype),
        grid=(B, nq),
        in_specs=[
            pl.BlockSpec((None, N, C), lambda b, qi: (b, 0, 0)),      # x (full seq / batch elt)
            pl.BlockSpec((G, C, gw), lambda b, qi: (0, 0, 0)),        # wq  (resident)
            pl.BlockSpec((G, 1, gw), lambda b, qi: (0, 0, 0)),        # bq
            pl.BlockSpec((C, 2 * C), lambda b, qi: (0, 0)),           # wkv (resident)
            pl.BlockSpec((1, 2 * C), lambda b, qi: (0, 0)),           # bkv
            pl.BlockSpec((G, gw, C), lambda b, qi: (0, 0, 0)),        # wproj (resident)
            pl.BlockSpec((1, C), lambda b, qi: (0, 0)),               # bproj
        ],
        out_specs=pl.BlockSpec((None, tq, C), lambda b, qi: (b, qi, 0)),
        scratch_shapes=[
            pltpu.VMEM((G, N, gw), mxu_dtype),     # K per head group
            pltpu.VMEM((G, N, gw), mxu_dtype),     # V per head group
            pltpu.VMEM((tq, C), mxu_dtype),        # query-tile activations
            pltpu.VMEM((tq, C), jnp.float32),      # output accumulator
        ],
        compiler_params=pltpu.CompilerParams(
            # batch parallel (v7x: 2 TCs); query-tile axis sequential because it
            # reuses the per-batch K/V scratch.
            # TODO(synk): for B == 1 on v7x, recompute K/V per tile and mark the
            # query axis parallel to use both TensorCores.
            dimension_semantics=("parallel", "arbitrary"),
            vmem_limit_bytes=_default_vmem_limit(),
        ),
    )(x_in, wq_g, bq_g, wkv, bkv, wp_g, bp)


# ----------------------------------------------------------------------------
# Pure-JAX reference (mirrors the PyTorch forward) for a sanity check
# ----------------------------------------------------------------------------
def reference_forward(x, params, num_heads):
    B, N, C = x.shape
    hd = C // num_heads
    qkv = x @ params["qkv_w"] + params["qkv_b"]
    qkv = qkv.reshape(B, N, 3, num_heads, hd)
    q = jnp.transpose(qkv[:, :, 0], (0, 2, 1, 3))
    k = jnp.transpose(qkv[:, :, 1], (0, 2, 1, 3))
    v = jnp.transpose(qkv[:, :, 2], (0, 2, 1, 3))
    s = (q * (1.0 / math.sqrt(hd))) @ jnp.swapaxes(k, -1, -2)
    p = jax.nn.softmax(s, axis=-1)
    o = p @ v
    o = jnp.transpose(o, (0, 2, 1, 3)).reshape(B, N, C)
    return o @ params["proj_w"] + params["proj_b"]


if __name__ == "__main__":
    # Module hyperparameters (DINOv2-style): head_dim=16, scale=head_dim**-0.5,
    # num_heads=2  =>  dim = int(scale**-2 * num_heads) = 32.
    num_heads = 2
    head_dim = 16
    dim = num_heads * head_dim            # 32
    B, N, C = 2, 8, dim

    key = jax.random.PRNGKey(0)
    kx, kqw, kqb, kpw, kpb = jax.random.split(key, 5)
    x = jax.random.normal(kx, (B, N, C), dtype=jnp.float32)

    # nn.Linear(dim, 3*dim) / nn.Linear(dim, dim), stored transposed (in, out).
    bound = 1.0 / math.sqrt(dim)
    params = {
        "qkv_w": jax.random.uniform(kqw, (C, 3 * C), jnp.float32, -bound, bound),
        "qkv_b": jax.random.uniform(kqb, (3 * C,), jnp.float32, -bound, bound),
        "proj_w": jax.random.uniform(kpw, (C, C), jnp.float32, -bound, bound),
        "proj_b": jax.random.uniform(kpb, (C,), jnp.float32, -bound, bound),
    }

    ref = reference_forward(x, params, num_heads)

    # Default fast path: bf16 MXU operands, f32 accumulation, f32 softmax.
    out = jax.block_until_ready(pallas_custom_attention(x, params, num_heads))
    assert out.shape == (B, N, C) and out.dtype == x.dtype
    assert jnp.allclose(out, ref, atol=1e-1, rtol=1e-1), "bf16 path mismatch vs reference"

    # Faithful f32 path (f32 MXU operands, exact softmax normalization).
    out_f32 = jax.block_until_ready(
        pallas_custom_attention(x, params, num_heads, mxu_dtype=jnp.float32))
    assert jnp.allclose(out_f32, ref, atol=2e-3, rtol=2e-3), "f32 path mismatch vs reference"

    print("KERNEL_OK")
</pallas_src>

<mosaic_0001>
module attributes {stable_mosaic.version = 11 : i64} {
  func.func @_fused_attention_kernel(%arg0: i32, %arg1: i32, %arg2: memref<1x8x32xbf16, #tpu.memory_space<vmem>>, %arg3: memref<1x32x32xbf16, #tpu.memory_space<vmem>>, %arg4: memref<1x1x32xf32, #tpu.memory_space<vmem>>, %arg5: memref<32x64xbf16, #tpu.memory_space<vmem>>, %arg6: memref<1x64xf32, #tpu.memory_space<vmem>>, %arg7: memref<1x32x32xbf16, #tpu.memory_space<vmem>>, %arg8: memref<1x32xf32, #tpu.memory_space<vmem>>, %arg9: memref<1x8x32xf32, #tpu.memory_space<vmem>>, %arg10: memref<1x8x32xbf16, #tpu.memory_space<vmem>>, %arg11: memref<1x8x32xbf16, #tpu.memory_space<vmem>>, %arg12: memref<8x32xbf16, #tpu.memory_space<vmem>>, %arg13: memref<8x32xf32, #tpu.memory_space<vmem>>) attributes {dimension_semantics = [#tpu.dimension_semantics<parallel>, #tpu.dimension_semantics<arbitrary>], iteration_bounds = array<i64: 2, 1>, scalar_prefetch = 0 : i64, scratch_operands = 4 : i64, tpu.core_type = #tpu.core_type<tc>, window_params = [{transform_indices = @transform_0, window_bounds = array<i64: 1, 8, 32>}, {pipeline_mode = #tpu.pipeline_mode<synchronous>, transform_indices = @transform_1, window_bounds = array<i64: 1, 32, 32>}, {pipeline_mode = #tpu.pipeline_mode<synchronous>, transform_indices = @transform_2, window_bounds = array<i64: 1, 1, 32>}, {pipeline_mode = #tpu.pipeline_mode<synchronous>, transform_indices = @transform_3, window_bounds = array<i64: 32, 64>}, {pipeline_mode = #tpu.pipeline_mode<synchronous>, transform_indices = @transform_4, window_bounds = array<i64: 1, 64>}, {pipeline_mode = #tpu.pipeline_mode<synchronous>, transform_indices = @transform_5, window_bounds = array<i64: 1, 32, 32>}, {pipeline_mode = #tpu.pipeline_mode<synchronous>, transform_indices = @transform_6, window_bounds = array<i64: 1, 32>}, {transform_indices = @transform_7, window_bounds = array<i64: 1, 8, 32>}]} {
    %c0_i32 = arith.constant 0 : i32
    %0 = arith.cmpi eq, %arg1, %c0_i32 : i32
    %1 = arith.extui %0 : i1 to i32
    %c0_i32_0 = arith.constant 0 : i32
    %2 = arith.cmpi ne, %1, %c0_i32_0 : i32
    scf.if %2 {
      %c0_40 = arith.constant 0 : index
      %c0_41 = arith.constant 0 : index
      %c0_42 = arith.constant 0 : index
      %77 = vector.load %arg2[%c0_40, %c0_41, %c0_42] : memref<1x8x32xbf16, #tpu.memory_space<vmem>>, vector<1x8x32xbf16>
      %78 = vector.shape_cast %77 : vector<1x8x32xbf16> to vector<8x32xbf16>
      %c0_43 = arith.constant 0 : index
      %c0_44 = arith.constant 0 : index
      %79 = vector.load %arg5[%c0_43, %c0_44] : memref<32x64xbf16, #tpu.memory_space<vmem>>, vector<32x64xbf16>
      %cst_45 = arith.constant dense<0.000000e+00> : vector<8x64xf32>
      %80 = tpu.matmul %78, %79, %cst_45 {dimension_numbers = #tpu.dot_dimension_numbers<[1], [0], [0], [1], [0, 0, 1, 1], [], []>} : vector<8x32xbf16>, vector<32x64xbf16>, vector<8x64xf32> -> vector<8x64xf32>
      %c0_46 = arith.constant 0 : index
      %c0_47 = arith.constant 0 : index
      %81 = vector.load %arg6[%c0_46, %c0_47] : memref<1x64xf32, #tpu.memory_space<vmem>>, vector<1x64xf32>
      %82 = vector.broadcast %81 : vector<1x64xf32> to vector<8x64xf32>
      %83 = arith.addf %80, %82 : vector<8x64xf32>
      %84 = arith.truncf %83 : vector<8x64xf32> to vector<8x64xbf16>
      %85 = vector.extract_strided_slice %84 {offsets = [0, 0], sizes = [8, 32], strides = [1, 1]} : vector<8x64xbf16> to vector<8x32xbf16>
      %c0_48 = arith.constant 0 : index
      %c0_49 = arith.constant 0 : index
      %c0_50 = arith.constant 0 : index
      %86 = vector.load %arg10[%c0_48, %c0_49, %c0_50] : memref<1x8x32xbf16, #tpu.memory_space<vmem>>, vector<1x8x32xbf16>
      %87 = vector.shape_cast %86 : vector<1x8x32xbf16> to vector<8x32xbf16>
      %88 = vector.shape_cast %85 : vector<8x32xbf16> to vector<1x8x32xbf16>
      tpu.vector_store %arg10[%c0_48, %c0_49, %c0_50], %88 {strides = array<i32>} : memref<1x8x32xbf16, #tpu.memory_space<vmem>>, vector<1x8x32xbf16>,
      %89 = vector.extract_strided_slice %84 {offsets = [0, 32], sizes = [8, 32], strides = [1, 1]} : vector<8x64xbf16> to vector<8x32xbf16>
      %c0_51 = arith.constant 0 : index
      %c0_52 = arith.constant 0 : index
      %c0_53 = arith.constant 0 : index
      %90 = vector.load %arg11[%c0_51, %c0_52, %c0_53] : memref<1x8x32xbf16, #tpu.memory_space<vmem>>, vector<1x8x32xbf16>
      %91 = vector.shape_cast %90 : vector<1x8x32xbf16> to vector<8x32xbf16>
      %92 = vector.shape_cast %89 : vector<8x32xbf16> to vector<1x8x32xbf16>
      tpu.vector_store %arg11[%c0_51, %c0_52, %c0_53], %92 {strides = array<i32>} : memref<1x8x32xbf16, #tpu.memory_space<vmem>>, vector<1x8x32xbf16>,
    } else {
    }
    %c8_i32 = arith.constant 8 : i32
    %3 = arith.muli %arg1, %c8_i32 : i32
    %4 = tpu.assume_multiple %3, 8 : i32
    %c0 = arith.constant 0 : index
    %5 = arith.index_cast %4 : i32 to index
    %c0_1 = arith.constant 0 : index
    %6 = vector.load %arg2[%c0, %5, %c0_1] : memref<1x8x32xbf16, #tpu.memory_space<vmem>>, vector<1x8x32xbf16>
    %7 = vector.shape_cast %6 : vector<1x8x32xbf16> to vector<8x32xbf16>
    %c0_2 = arith.constant 0 : index
    %c0_3 = arith.constant 0 : index
    %8 = vector.load %arg12[%c0_2, %c0_3] : memref<8x32xbf16, #tpu.memory_space<vmem>>, vector<8x32xbf16>
    tpu.vector_store %arg12[%c0_2, %c0_3], %7 {strides = array<i32>} : memref<8x32xbf16, #tpu.memory_space<vmem>>, vector<8x32xbf16>,
    %cst = arith.constant 0.000000e+00 : f32
    %9 = vector.broadcast %cst : f32 to vector<8x32xf32>
    %c0_4 = arith.constant 0 : index
    %c0_5 = arith.constant 0 : index
    %10 = vector.load %arg13[%c0_4, %c0_5] : memref<8x32xf32, #tpu.memory_space<vmem>>, vector<8x32xf32>
    tpu.vector_store %arg13[%c0_4, %c0_5], %9 {strides = array<i32>} : memref<8x32xf32, #tpu.memory_space<vmem>>, vector<8x32xf32>,
    %c0_i32_6 = arith.constant 0 : i32
    %c0_7 = arith.constant 0 : index
    %c0_8 = arith.constant 0 : index
    %11 = vector.load %arg12[%c0_7, %c0_8] : memref<8x32xbf16, #tpu.memory_space<vmem>>, vector<8x32xbf16>
    %12 = arith.index_cast %c0_i32_6 : i32 to index
    %c0_9 = arith.constant 0 : index
    %c0_10 = arith.constant 0 : index
    %13 = vector.load %arg3[%12, %c0_9, %c0_10] : memref<1x32x32xbf16, #tpu.memory_space<vmem>>, vector<1x32x32xbf16>
    %14 = vector.shape_cast %13 : vector<1x32x32xbf16> to vector<32x32xbf16>
    %cst_11 = arith.constant dense<0.000000e+00> : vector<8x32xf32>
    %15 = tpu.matmul %11, %14, %cst_11 {dimension_numbers = #tpu.dot_dimension_numbers<[1], [0], [0], [1], [0, 0, 1, 1], [], []>} : vector<8x32xbf16>, vector<32x32xbf16>, vector<8x32xf32> -> vector<8x32xf32>
    %16 = arith.index_cast %c0_i32_6 : i32 to index
    %c0_12 = arith.constant 0 : index
    %c0_13 = arith.constant 0 : index
    %17 = vector.load %arg4[%16, %c0_12, %c0_13] : memref<1x1x32xf32, #tpu.memory_space<vmem>>, vector<1x1x32xf32>
    %18 = vector.shape_cast %17 : vector<1x1x32xf32> to vector<1x32xf32>
    %19 = vector.broadcast %18 : vector<1x32xf32> to vector<8x32xf32>
    %20 = arith.addf %15, %19 : vector<8x32xf32>
    %21 = arith.index_cast %c0_i32_6 : i32 to index
    %c0_14 = arith.constant 0 : index
    %c0_15 = arith.constant 0 : index
    %22 = vector.load %arg10[%21, %c0_14, %c0_15] : memref<1x8x32xbf16, #tpu.memory_space<vmem>>, vector<1x8x32xbf16>
    %23 = vector.shape_cast %22 : vector<1x8x32xbf16> to vector<8x32xbf16>
    %24 = arith.index_cast %c0_i32_6 : i32 to index
    %c0_16 = arith.constant 0 : index
    %c0_17 = arith.constant 0 : index
    %25 = vector.load %arg11[%24, %c0_16, %c0_17] : memref<1x8x32xbf16, #tpu.memory_space<vmem>>, vector<1x8x32xbf16>
    %26 = vector.shape_cast %25 : vector<1x8x32xbf16> to vector<8x32xbf16>
    %27 = vector.extract_strided_slice %20 {offsets = [0, 0], sizes = [8, 16], strides = [1, 1]} : vector<8x32xf32> to vector<8x16xf32>
    %28 = arith.truncf %27 : vector<8x16xf32> to vector<8x16xbf16>
    %29 = vector.extract_strided_slice %23 {offsets = [0, 0], sizes = [8, 16], strides = [1, 1]} : vector<8x32xbf16> to vector<8x16xbf16>
    %30 = vector.extract_strided_slice %26 {offsets = [0, 0], sizes = [8, 16], strides = [1, 1]} : vector<8x32xbf16> to vector<8x16xbf16>
    %cst_18 = arith.constant dense<0.000000e+00> : vector<8x8xf32>
    %31 = tpu.matmul %28, %29, %cst_18 {dimension_numbers = #tpu.dot_dimension_numbers<[1], [1], [0], [0], [0, 0, 1, 0], [], []>} : vector<8x16xbf16>, vector<8x16xbf16>, vector<8x8xf32> -> vector<8x8xf32>
    %cst_19 = arith.constant dense<0xFF800000> : vector<8xf32>
    %32 = vector.multi_reduction <maximumf>, %31, %cst_19 [1] : vector<8x8xf32> to vector<8xf32>
    %33 = vector.shape_cast %32 : vector<8xf32> to vector<8x1xf32>
    %34 = vector.broadcast %33 : vector<8x1xf32> to vector<8x8xf32>
    %35 = arith.subf %31, %34 : vector<8x8xf32>
    %36 = math.exp %35 : vector<8x8xf32>
    %cst_20 = arith.constant dense<0.000000e+00> : vector<8xf32>
    %37 = vector.multi_reduction <add>, %36, %cst_20 [1] : vector<8x8xf32> to vector<8xf32>
    %38 = vector.shape_cast %37 : vector<8xf32> to vector<8x1xf32>
    %39 = tpu.reciprocal %38 {approx = true} : vector<8x1xf32> -> vector<8x1xf32>
    %40 = vector.broadcast %39 : vector<8x1xf32> to vector<8x8xf32>
    %41 = arith.mulf %36, %40 : vector<8x8xf32>
    %42 = arith.truncf %41 : vector<8x8xf32> to vector<8x8xbf16>
    %cst_21 = arith.constant dense<0.000000e+00> : vector<8x16xf32>
    %43 = tpu.matmul %42, %30, %cst_21 {dimension_numbers = #tpu.dot_dimension_numbers<[1], [0], [0], [1], [0, 0, 1, 1], [], []>} : vector<8x8xbf16>, vector<8x16xbf16>, vector<8x16xf32> -> vector<8x16xf32>
    %44 = vector.extract_strided_slice %20 {offsets = [0, 16], sizes = [8, 16], strides = [1, 1]} : vector<8x32xf32> to vector<8x16xf32>
    %45 = arith.truncf %44 : vector<8x16xf32> to vector<8x16xbf16>
    %46 = vector.extract_strided_slice %23 {offsets = [0, 16], sizes = [8, 16], strides = [1, 1]} : vector<8x32xbf16> to vector<8x16xbf16>
    %47 = vector.extract_strided_slice %26 {offsets = [0, 16], sizes = [8, 16], strides = [1, 1]} : vector<8x32xbf16> to vector<8x16xbf16>
    %cst_22 = arith.constant dense<0.000000e+00> : vector<8x8xf32>
    %48 = tpu.matmul %45, %46, %cst_22 {dimension_numbers = #tpu.dot_dimension_numbers<[1], [1], [0], [0], [0, 0, 1, 0], [], []>} : vector<8x16xbf16>, vector<8x16xbf16>, vector<8x8xf32> -> vector<8x8xf32>
    %cst_23 = arith.constant dense<0xFF800000> : vector<8xf32>
    %49 = vector.multi_reduction <maximumf>, %48, %cst_23 [1] : vector<8x8xf32> to vector<8xf32>
    %50 = vector.shape_cast %49 : vector<8xf32> to vector<8x1xf32>
    %51 = vector.broadcast %50 : vector<8x1xf32> to vector<8x8xf32>
    %52 = arith.subf %48, %51 : vector<8x8xf32>
    %53 = math.exp %52 : vector<8x8xf32>
    %cst_24 = arith.constant dense<0.000000e+00> : vector<8xf32>
    %54 = vector.multi_reduction <add>, %53, %cst_24 [1] : vector<8x8xf32> to vector<8xf32>
    %55 = vector.shape_cast %54 : vector<8xf32> to vector<8x1xf32>
    %56 = tpu.reciprocal %55 {approx = true} : vector<8x1xf32> -> vector<8x1xf32>
    %57 = vector.broadcast %56 : vector<8x1xf32> to vector<8x8xf32>
    %58 = arith.mulf %53, %57 : vector<8x8xf32>
    %59 = arith.truncf %58 : vector<8x8xf32> to vector<8x8xbf16>
    %cst_25 = arith.constant dense<0.000000e+00> : vector<8x16xf32>
    %60 = tpu.matmul %59, %47, %cst_25 {dimension_numbers = #tpu.dot_dimension_numbers<[1], [0], [0], [1], [0, 0, 1, 1], [], []>} : vector<8x8xbf16>, vector<8x16xbf16>, vector<8x16xf32> -> vector<8x16xf32>
    %61 = tpu.concatenate %43, %60 in 1 : vector<8x16xf32>, vector<8x16xf32> -> vector<8x32xf32>
    %c0_26 = arith.constant 0 : index
    %c0_27 = arith.constant 0 : index
    %62 = vector.load %arg13[%c0_26, %c0_27] : memref<8x32xf32, #tpu.memory_space<vmem>>, vector<8x32xf32>
    %63 = arith.truncf %61 : vector<8x32xf32> to vector<8x32xbf16>
    %64 = arith.index_cast %c0_i32_6 : i32 to index
    %c0_28 = arith.constant 0 : index
    %c0_29 = arith.constant 0 : index
    %65 = vector.load %arg7[%64, %c0_28, %c0_29] : memref<1x32x32xbf16, #tpu.memory_space<vmem>>, vector<1x32x32xbf16>
    %66 = vector.shape_cast %65 : vector<1x32x32xbf16> to vector<32x32xbf16>
    %cst_30 = arith.constant dense<0.000000e+00> : vector<8x32xf32>
    %67 = tpu.matmul %63, %66, %cst_30 {dimension_numbers = #tpu.dot_dimension_numbers<[1], [0], [0], [1], [0, 0, 1, 1], [], []>} : vector<8x32xbf16>, vector<32x32xbf16>, vector<8x32xf32> -> vector<8x32xf32>
    %68 = arith.addf %62, %67 : vector<8x32xf32>
    %c0_31 = arith.constant 0 : index
    %c0_32 = arith.constant 0 : index
    %69 = vector.load %arg13[%c0_31, %c0_32] : memref<8x32xf32, #tpu.memory_space<vmem>>, vector<8x32xf32>
    tpu.vector_store %arg13[%c0_31, %c0_32], %68 {strides = array<i32>} : memref<8x32xf32, #tpu.memory_space<vmem>>, vector<8x32xf32>,
    %c1_i32 = arith.constant 1 : i32
    %c0_33 = arith.constant 0 : index
    %c0_34 = arith.constant 0 : index
    %70 = vector.load %arg13[%c0_33, %c0_34] : memref<8x32xf32, #tpu.memory_space<vmem>>, vector<8x32xf32>
    %c0_35 = arith.constant 0 : index
    %c0_36 = arith.constant 0 : index
    %71 = vector.load %arg8[%c0_35, %c0_36] : memref<1x32xf32, #tpu.memory_space<vmem>>, vector<1x32xf32>
    %72 = vector.broadcast %71 : vector<1x32xf32> to vector<8x32xf32>
    %73 = arith.addf %70, %72 : vector<8x32xf32>
    %c0_37 = arith.constant 0 : index
    %c0_38 = arith.constant 0 : index
    %c0_39 = arith.constant 0 : index
    %74 = vector.load %arg9[%c0_37, %c0_38, %c0_39] : memref<1x8x32xf32, #tpu.memory_space<vmem>>, vector<1x8x32xf32>
    %75 = vector.shape_cast %74 : vector<1x8x32xf32> to vector<8x32xf32>
    %76 = vector.shape_cast %73 : vector<8x32xf32> to vector<1x8x32xf32>
    tpu.vector_store %arg9[%c0_37, %c0_38, %c0_39], %76 {strides = array<i32>} : memref<1x8x32xf32, #tpu.memory_space<vmem>>, vector<1x8x32xf32>,
    return
  }
  func.func @transform_0(%arg0: i32, %arg1: i32) -> (i32, i32, i32) {
    %c0_i32 = arith.constant 0 : i32
    %c0_i32_0 = arith.constant 0 : i32
    %c0_i32_1 = arith.constant 0 : i32
    return %arg0, %c0_i32, %c0_i32_0 : i32, i32, i32
  }
  func.func @transform_1(%arg0: i32, %arg1: i32) -> (i32, i32, i32) {
    %c0_i32 = arith.constant 0 : i32
    %c0_i32_0 = arith.constant 0 : i32
    %c0_i32_1 = arith.constant 0 : i32
    %c0_i32_2 = arith.constant 0 : i32
    return %c0_i32, %c0_i32_0, %c0_i32_1 : i32, i32, i32
  }
  func.func @transform_2(%arg0: i32, %arg1: i32) -> (i32, i32, i32) {
    %c0_i32 = arith.constant 0 : i32
    %c0_i32_0 = arith.constant 0 : i32
    %c0_i32_1 = arith.constant 0 : i32
    %c0_i32_2 = arith.constant 0 : i32
    return %c0_i32, %c0_i32_0, %c0_i32_1 : i32, i32, i32
  }
  func.func @transform_3(%arg0: i32, %arg1: i32) -> (i32, i32) {
    %c0_i32 = arith.constant 0 : i32
    %c0_i32_0 = arith.constant 0 : i32
    %c0_i32_1 = arith.constant 0 : i32
    return %c0_i32, %c0_i32_0 : i32, i32
  }
  func.func @transform_4(%arg0: i32, %arg1: i32) -> (i32, i32) {
    %c0_i32 = arith.constant 0 : i32
    %c0_i32_0 = arith.constant 0 : i32
    %c0_i32_1 = arith.constant 0 : i32
    return %c0_i32, %c0_i32_0 : i32, i32
  }
  func.func @transform_5(%arg0: i32, %arg1: i32) -> (i32, i32, i32) {
    %c0_i32 = arith.constant 0 : i32
    %c0_i32_0 = arith.constant 0 : i32
    %c0_i32_1 = arith.constant 0 : i32
    %c0_i32_2 = arith.constant 0 : i32
    return %c0_i32, %c0_i32_0, %c0_i32_1 : i32, i32, i32
  }
  func.func @transform_6(%arg0: i32, %arg1: i32) -> (i32, i32) {
    %c0_i32 = arith.constant 0 : i32
    %c0_i32_0 = arith.constant 0 : i32
    %c0_i32_1 = arith.constant 0 : i32
    return %c0_i32, %c0_i32_0 : i32, i32
  }
  func.func @transform_7(%arg0: i32, %arg1: i32) -> (i32, i32, i32) {
    %c0_i32 = arith.constant 0 : i32
    %c0_i32_0 = arith.constant 0 : i32
    return %arg0, %arg1, %c0_i32 : i32, i32, i32
  }
}

</mosaic_0001>

<llo_original>
// kernel: tpu_custom_call.1
$region0: #{tpu_custom_call.1}
  #allocation0 [shape = 'u32[]', space=smem, size = 0x4, offset = 0x4, fixed_abs, tag = 'smem constant byte address 0x4 - core index']
  #allocation1 [shape = 'u32[144,128]{1,0:T(1,128)}', space=vmem, size = 0x12000, scoped, tag = 'internal scratch']
  #allocation2 [shape = 'bf16[1,8,32]{2,1,0:T(8,128)(2,1)}', space=vmem, size = 0x800, scoped, tag = 'scratch operand']
  #allocation3 [shape = 'bf16[1,8,32]{2,1,0:T(8,128)(2,1)}', space=vmem, size = 0x800, scoped, tag = 'scratch operand']
  #allocation4 [shape = 'bf16[8,32]{1,0:T(8,128)(2,1)}', space=vmem, size = 0x800, scoped, tag = 'scratch operand']
  #allocation5 [shape = 'f32[8,32]{1,0:T(8,128)}', space=vmem, size = 0x1000, scoped, tag = 'scratch operand']
  %s0 = inlined_call_operand.hbm [shape: bf16[2,8,32], index: 0, kind: input, shape index: {}]
  %s1 = inlined_call_operand.hbm [shape: bf16[1,32,32], index: 1, kind: input, shape index: {}]
  %s2 = inlined_call_operand.vmem [shape: f32[1,1,32], index: 2, kind: input, shape index: {}]
  %s3 = inlined_call_operand.hbm [shape: bf16[32,64], index: 3, kind: input, shape index: {}]
  %s4 = inlined_call_operand.vmem [shape: f32[1,64], index: 4, kind: input, shape index: {}]
  %s5 = inlined_call_operand.vmem [shape: bf16[1,32,32], index: 5, kind: input, shape index: {}]
  %s6 = inlined_call_operand.vmem [shape: f32[1,32], index: 6, kind: input, shape index: {}]
  %s7 = inlined_call_operand.hbm [shape: f32[2,8,32], index: 7, kind: output, shape index: {}]
  %s8 = sld [smem:[#allocation0]]
  $region77: #{tpu_custom_call.1} parent=0
    _
  %s10 = ssub.s32 1, %s8
  %s11 = scalar_select 0, %s10, %s8
  $region1: #{tpu_custom_call.1} parent=0
    #allocation6 [shape = 'u8[4096]{0}', space=vmem, size = 0x1000, scoped, tag = 'input window, operand 0']
    #allocation7 [shape = 's32[2]{0}', space=sflag, size = 0x8, scoped, tag = 'scoped memory for tpu_custom_call.1']
    #allocation8 [shape = 's32[2]{0}', space=sflag, size = 0x8, scoped, tag = 'scoped memory for tpu_custom_call.1']
    #allocation9 [shape = 'u8[8192]{0}', space=vmem, size = 0x2000, scoped, tag = 'input window, operand 1, single buffered']
    #allocation10 [shape = 's32[1]{0}', space=sflag, size = 0x4, scoped, tag = 'scoped memory for tpu_custom_call.1']
    #allocation11 [shape = 'u8[8192]{0}', space=vmem, size = 0x2000, scoped, tag = 'input window, operand 3, single buffered']
    #allocation12 [shape = 'u8[8192]{0}', space=vmem, size = 0x2000, scoped, tag = 'output window, operand 0']
    %12 = vsyncpa [#allocation7], 0
    %s13 = scalar_lea.sflag [#allocation7], 1
    %14 = vsyncpa %s13, 0
    %15 = vsyncpa [#allocation10], 0
    %16 = vsyncpa [#allocation8], 0
    %s17 = scalar_lea.sflag [#allocation8], 1
    %18 = vsyncpa %s17, 0
    loop: start=0, step=1, limit=4
    $region2: #{tpu_custom_call.1} parent=1 // loop_pre_header
      _
    $region3: #{tpu_custom_call.1} parent=1 // loop_header
      %s20 = sphi 0, %s24
      %p21 = scmp.ge.s32.totalorder %s20, 4
      %s27 = sphi 0, %s39
      %s28 = sphi 0, %s35
      %s29 = sphi 0, %s27
      %s30 = sphi 0, %s28
      %s31 = sphi 0, %s29
      %s32 = sphi 0, %s30
      %s42 = sphi 0, %s44
      %s45 = sphi 0, %s42
      %s46 = sphi 0, %s45
      %s62 = sphi 0, %s46
      %s66 = sphi 0, %s66
      %s68 = sphi 0, %s66
      %s69 = sphi 0, %s68
      %s83 = sphi 0, %s69
      %s87 = sphi 0, %s87
      %s89 = sphi 0, %s87
      %s90 = sphi 0, %s89
      %s104 = sphi 0, %s90
      %s108 = sphi 0, %s108
      %s110 = sphi 0, %s108
      %s111 = sphi 0, %s110
      %s125 = sphi 0, %s111
      %s129 = sphi 0, %s129
      %s131 = sphi 0, %s129
      %s132 = sphi 0, %s131
      %s146 = sphi 0, %s132
      %s150 = sphi 0, %s150
      %s152 = sphi 0, %s150
      %s153 = sphi 0, %s152
      %s167 = sphi 0, %s153
      %s171 = sphi 0, %s171
      %s173 = sphi 0, %s171
      %s174 = sphi 0, %s173
      %s188 = sphi 0, %s174
      %s196 = sphi 0, %s198
      %s199 = sphi 0, %s196
      %s200 = sphi 0, %s199
      %s216 = sphi 0, %s200
    $region4: #{tpu_custom_call.1} parent=1 // loop_header_branch
      %23 = sbr.rel (%p21) target = $region8
    $region5: #{tpu_custom_call.1} parent=1 // loop_body
      %s25 = ssub.s32 %s20, 1
      %s26 = ssub.s32 %s20, 2
      %s33 = sadd.s32 1, %s28
      %p34 = scmp.ge.s32.totalorder %s33, 1
      %s35 = scalar_select %p34, 0, %s33
      %s36 = sadd.s32 1, %s27
      %s37 = scalar_select %p34, %s36, %s27
      %p38 = scmp.ge.s32.totalorder %s37, 2
      %s39 = scalar_select %p38, 0, %s37
      %s40 = ssub.s32 %s27, %s39
      %p41 = scmp.eq.s32.totalorder %s40, 0
      %s43 = sadd.s32 %s42, 1
      %s44 = scalar_select %p41, %s42, %s43
      %p47 = pneg %p41
      %p48 = scmp.eq.s32.totalorder %s20, 1
      %p49 = por %p47, %p48
      %p50 = scmp.ne.s32.totalorder %s42, %s45
      %p51 = scmp.eq.s32.totalorder %s20, 0
      %p52 = por %p50, %p51
      %p53 = scmp.ne.s32.totalorder %s42, %s45
      %p54 = scmp.eq.s32.totalorder %s25, 1
      %p55 = por %p53, %p54
      %p56 = scmp.ne.s32.totalorder %s45, %s46
      %p57 = scmp.eq.s32.totalorder %s25, 0
      %p58 = por %p56, %p57
      %p59 = scmp.ne.s32.totalorder %s45, %s46
      %p60 = scmp.eq.s32.totalorder %s26, 1
      %p61 = por %p59, %p60
      %p63 = scmp.ne.s32.totalorder %s46, %s62
      %p64 = scmp.eq.s32.totalorder %s26, 0
      %p65 = por %p63, %p64
      %s67 = sadd.s32 %s66, 1
      %p70 = scmp.eq.s32.totalorder %s20, 1
      %p71 = scmp.ne.s32.totalorder %s66, %s68
      %p72 = scmp.eq.s32.totalorder %s20, 0
      %p73 = por %p71, %p72
      %p74 = scmp.ne.s32.totalorder %s66, %s68
      %p75 = scmp.eq.s32.totalorder %s25, 1
      %p76 = por %p74, %p75
      %p77 = scmp.ne.s32.totalorder %s68, %s69
      %p78 = scmp.eq.s32.totalorder %s25, 0
      %p79 = por %p77, %p78
      %p80 = scmp.ne.s32.totalorder %s68, %s69
      %p81 = scmp.eq.s32.totalorder %s26, 1
      %p82 = por %p80, %p81
      %p84 = scmp.ne.s32.totalorder %s69, %s83
      %p85 = scmp.eq.s32.totalorder %s26, 0
      %p86 = por %p84, %p85
      %s88 = sadd.s32 %s87, 1
      %p91 = scmp.eq.s32.totalorder %s20, 1
      %p92 = scmp.ne.s32.totalorder %s87, %s89
      %p93 = scmp.eq.s32.totalorder %s20, 0
      %p94 = por %p92, %p93
      %p95 = scmp.ne.s32.totalorder %s87, %s89
      %p96 = scmp.eq.s32.totalorder %s25, 1
      %p97 = por %p95, %p96
      %p98 = scmp.ne.s32.totalorder %s89, %s90
      %p99 = scmp.eq.s32.totalorder %s25, 0
      %p100 = por %p98, %p99
      %p101 = scmp.ne.s32.totalorder %s89, %s90
      %p102 = scmp.eq.s32.totalorder %s26, 1
      %p103 = por %p101, %p102
      %p105 = scmp.ne.s32.totalorder %s90, %s104
      %p106 = scmp.eq.s32.totalorder %s26, 0
      %p107 = por %p105, %p106
      %s109 = sadd.s32 %s108, 1
      %p112 = scmp.eq.s32.totalorder %s20, 1
      %p113 = scmp.ne.s32.totalorder %s108, %s110
      %p114 = scmp.eq.s32.totalorder %s20, 0
      %p115 = por %p113, %p114
      %p116 = scmp.ne.s32.totalorder %s108, %s110
      %p117 = scmp.eq.s32.totalorder %s25, 1
      %p118 = por %p116, %p117
      %p119 = scmp.ne.s32.totalorder %s110, %s111
      %p120 = scmp.eq.s32.totalorder %s25, 0
      %p121 = por %p119, %p120
      %p122 = scmp.ne.s32.totalorder %s110, %s111
      %p123 = scmp.eq.s32.totalorder %s26, 1
      %p124 = por %p122, %p123
      %p126 = scmp.ne.s32.totalorder %s111, %s125
      %p127 = scmp.eq.s32.totalorder %s26, 0
      %p128 = por %p126, %p127
      %s130 = sadd.s32 %s129, 1
      %p133 = scmp.eq.s32.totalorder %s20, 1
      %p134 = scmp.ne.s32.totalorder %s129, %s131
      %p135 = scmp.eq.s32.totalorder %s20, 0
      %p136 = por %p134, %p135
      %p137 = scmp.ne.s32.totalorder %s129, %s131
      %p138 = scmp.eq.s32.totalorder %s25, 1
      %p139 = por %p137, %p138
      %p140 = scmp.ne.s32.totalorder %s131, %s132
      %p141 = scmp.eq.s32.totalorder %s25, 0
      %p142 = por %p140, %p141
      %p143 = scmp.ne.s32.totalorder %s131, %s132
      %p144 = scmp.eq.s32.totalorder %s26, 1
      %p145 = por %p143, %p144
      %p147 = scmp.ne.s32.totalorder %s132, %s146
      %p148 = scmp.eq.s32.totalorder %s26, 0
      %p149 = por %p147, %p148
      %s151 = sadd.s32 %s150, 1
      %p154 = scmp.eq.s32.totalorder %s20, 1
      %p155 = scmp.ne.s32.totalorder %s150, %s152
      %p156 = scmp.eq.s32.totalorder %s20, 0
      %p157 = por %p155, %p156
      %p158 = scmp.ne.s32.totalorder %s150, %s152
      %p159 = scmp.eq.s32.totalorder %s25, 1
      %p160 = por %p158, %p159
      %p161 = scmp.ne.s32.totalorder %s152, %s153
      %p162 = scmp.eq.s32.totalorder %s25, 0
      %p163 = por %p161, %p162
      %p164 = scmp.ne.s32.totalorder %s152, %s153
      %p165 = scmp.eq.s32.totalorder %s26, 1
      %p166 = por %p164, %p165
      %p168 = scmp.ne.s32.totalorder %s153, %s167
      %p169 = scmp.eq.s32.totalorder %s26, 0
      %p170 = por %p168, %p169
      %s172 = sadd.s32 %s171, 1
      %p175 = scmp.eq.s32.totalorder %s20, 1
      %p176 = scmp.ne.s32.totalorder %s171, %s173
      %p177 = scmp.eq.s32.totalorder %s20, 0
      %p178 = por %p176, %p177
      %p179 = scmp.ne.s32.totalorder %s171, %s173
      %p180 = scmp.eq.s32.totalorder %s25, 1
      %p181 = por %p179, %p180
      %p182 = scmp.ne.s32.totalorder %s173, %s174
      %p183 = scmp.eq.s32.totalorder %s25, 0
      %p184 = por %p182, %p183
      %p185 = scmp.ne.s32.totalorder %s173, %s174
      %p186 = scmp.eq.s32.totalorder %s26, 1
      %p187 = por %p185, %p186
      %p189 = scmp.ne.s32.totalorder %s174, %s188
      %p190 = scmp.eq.s32.totalorder %s26, 0
      %p191 = por %p189, %p190
      %s192 = ssub.s32 %s27, %s39
      %s193 = ssub.s32 %s28, %s35
      %s194 = sor.u32 %s192, %s193
      %p195 = scmp.eq.s32.totalorder %s194, 0
      %s197 = sadd.s32 %s196, 1
      %s198 = scalar_select %p195, %s196, %s197
      %p201 = pneg %p195
      %p202 = scmp.eq.s32.totalorder %s20, 1
      %p203 = por %p201, %p202
      %p204 = scmp.ne.s32.totalorder %s196, %s199
      %p205 = scmp.eq.s32.totalorder %s20, 0
      %p206 = por %p204, %p205
      %p207 = scmp.ne.s32.totalorder %s196, %s199
      %p208 = scmp.eq.s32.totalorder %s25, 1
      %p209 = por %p207, %p208
      %p210 = scmp.ne.s32.totalorder %s199, %s200
      %p211 = scmp.eq.s32.totalorder %s25, 0
      %p212 = por %p210, %p211
      %p213 = scmp.ne.s32.totalorder %s199, %s200
      %p214 = scmp.eq.s32.totalorder %s26, 1
      %p215 = por %p213, %p214
      %p217 = scmp.ne.s32.totalorder %s200, %s216
      %p218 = scmp.eq.s32.totalorder %s26, 0
      %p219 = por %p217, %p218
      %p220 = scmp.le.s32.totalorder 1, %s20
      %p221 = scmp.lt.s32.totalorder %s20, 3
      %p222 = pnand %p220, %p221
      %p223 = pneg %p222
      // Predicated region
      $region9: #{tpu_custom_call.1} parent=5 // pred_check
        _
      $region10: #{tpu_custom_call.1} parent=5 // pred_check_branch
        %225 = sbr.rel (%p222) target = $region12
      $region11: #{tpu_custom_call.1} parent=5 // pred_region
        %s226 = ssub.s32 %s20, 1
        // Predicated region
        $region13: #{tpu_custom_call.1} parent=11 // pred_check
          %p227 = pneg %p79
        $region14: #{tpu_custom_call.1} parent=11 // pred_check_branch
          %229 = sbr.rel (%p227) target = $region16
        $region15: #{tpu_custom_call.1} parent=11 // pred_region
          %s231 = ssub.s32 256, 256
          %232 = vsyncadd [#allocation10], %s231
          %s233 = sshll.u32 [#allocation9], 4
          %s234 = int_to_ptr.vmem [resolvable:$true] %s233
          %239 = dma.hbm_to_vmem [thread:$0]  %s1, 256, %s234, [#allocation10], 64, 64, 4
        $region16: #{tpu_custom_call.1} parent=11 // pred_fallthru
          _
        // Predicated region
        $region17: #{tpu_custom_call.1} parent=11 // pred_check
          %p240 = pneg %p100
        $region18: #{tpu_custom_call.1} parent=11 // pred_check_branch
          %242 = sbr.rel (%p240) target = $region20
        $region19: #{tpu_custom_call.1} parent=11 // pred_region
          _
        $region20: #{tpu_custom_call.1} parent=11 // pred_fallthru
          _
        // Predicated region
        $region21: #{tpu_custom_call.1} parent=11 // pred_check
          %p243 = pneg %p121
        $region22: #{tpu_custom_call.1} parent=11 // pred_check_branch
          %245 = sbr.rel (%p243) target = $region24
        $region23: #{tpu_custom_call.1} parent=11 // pred_region
          %s247 = ssub.s32 256, 256
          %248 = vsyncadd [#allocation10], %s247
          %s249 = sshll.u32 [#allocation11], 4
          %s250 = int_to_ptr.vmem [resolvable:$true] %s249
          %255 = dma.hbm_to_vmem [thread:$0]  %s3, 256, %s250, [#allocation10], 64, 64, 4
        $region24: #{tpu_custom_call.1} parent=11 // pred_fallthru
          _
        // Predicated region
        $region25: #{tpu_custom_call.1} parent=11 // pred_check
          %p256 = pneg %p142
        $region26: #{tpu_custom_call.1} parent=11 // pred_check_branch
          %258 = sbr.rel (%p256) target = $region28
        $region27: #{tpu_custom_call.1} parent=11 // pred_region
          _
        $region28: #{tpu_custom_call.1} parent=11 // pred_fallthru
          _
        // Predicated region
        $region29: #{tpu_custom_call.1} parent=11 // pred_check
          %p259 = pneg %p163
        $region30: #{tpu_custom_call.1} parent=11 // pred_check_branch
          %261 = sbr.rel (%p259) target = $region32
        $region31: #{tpu_custom_call.1} parent=11 // pred_region
          _
        $region32: #{tpu_custom_call.1} parent=11 // pred_fallthru
          _
        // Predicated region
        $region33: #{tpu_custom_call.1} parent=11 // pred_check
          %p262 = pneg %p184
        $region34: #{tpu_custom_call.1} parent=11 // pred_check_branch
          %264 = sbr.rel (%p262) target = $region36
        $region35: #{tpu_custom_call.1} parent=11 // pred_region
          _
        $region36: #{tpu_custom_call.1} parent=11 // pred_fallthru
          _
      $region12: #{tpu_custom_call.1} parent=5 // pred_fallthru
        _
      %p265 = scmp.lt.s32.totalorder %s20, 2
      // Predicated region
      $region37: #{tpu_custom_call.1} parent=5 // pred_check
        %p266 = pneg %p265
      $region38: #{tpu_custom_call.1} parent=5 // pred_check_branch
        %268 = sbr.rel (%p266) target = $region40
      $region39: #{tpu_custom_call.1} parent=5 // pred_region
        // Predicated region
        $region41: #{tpu_custom_call.1} parent=39 // pred_check
          %p269 = pneg %p52
        $region42: #{tpu_custom_call.1} parent=39 // pred_check_branch
          %271 = sbr.rel (%p269) target = $region44
        $region43: #{tpu_custom_call.1} parent=39 // pred_region
          %s272 = sand.u32 %s42, 1
          %s273 = scalar_lea.sflag [#allocation7], %s272
          %s274 = sand.u32 %s42, 1
          %s275 = smul.addr %s274, 4
          %s276 = scalar_lea.vmem [#allocation6], %s275
          %s278 = ssub.s32 64, 64
          %279 = vsyncadd %s273, %s278
          %s280 = smul.addr %s27, 64
          %s281 = scalar_lea.hbm %s0, %s280
          %s283 = sshll.u32 %s276, 4
          %s284 = int_to_ptr.vmem [resolvable:$true] %s283
          %286 = dma.hbm_to_vmem [thread:$0]  %s281, 64, %s284, %s273
        $region44: #{tpu_custom_call.1} parent=39 // pred_fallthru
          _
      $region40: #{tpu_custom_call.1} parent=5 // pred_fallthru
        _
      %p287 = scmp.le.s32.totalorder 1, %s20
      %p288 = scmp.lt.s32.totalorder %s20, 3
      %p289 = pnand %p287, %p288
      %p290 = pneg %p289
      // Predicated region
      $region45: #{tpu_custom_call.1} parent=5 // pred_check
        _
      $region46: #{tpu_custom_call.1} parent=5 // pred_check_branch
        %292 = sbr.rel (%p289) target = $region48
      $region47: #{tpu_custom_call.1} parent=5 // pred_region
        %s293 = ssub.s32 %s20, 1
        %s294 = sand.u32 %s45, 1
        %s295 = scalar_lea.sflag [#allocation7], %s294
        %s296 = sand.u32 %s45, 1
        %s297 = smul.addr %s296, 4
        %s298 = scalar_lea.vmem [#allocation6], %s297
        // Predicated region
        $region49: #{tpu_custom_call.1} parent=47 // pred_check
          %p299 = pneg %p58
        $region50: #{tpu_custom_call.1} parent=47 // pred_check_branch
          %301 = sbr.rel (%p299) target = $region52
        $region51: #{tpu_custom_call.1} parent=47 // pred_region
          %302 = dma.done %s295, 64
        $region52: #{tpu_custom_call.1} parent=47 // pred_fallthru
          _
        // Predicated region
        $region53: #{tpu_custom_call.1} parent=47 // pred_check
          %p303 = pneg %p79
        $region54: #{tpu_custom_call.1} parent=47 // pred_check_branch
          %305 = sbr.rel (%p303) target = $region56
        $region55: #{tpu_custom_call.1} parent=47 // pred_region
          %306 = dma.done [#allocation10], 256
        $region56: #{tpu_custom_call.1} parent=47 // pred_fallthru
          _
        // Predicated region
        $region57: #{tpu_custom_call.1} parent=47 // pred_check
          %p307 = pneg %p121
        $region58: #{tpu_custom_call.1} parent=47 // pred_check_branch
          %309 = sbr.rel (%p307) target = $region60
        $region59: #{tpu_custom_call.1} parent=47 // pred_region
          %310 = dma.done [#allocation10], 256
        $region60: #{tpu_custom_call.1} parent=47 // pred_fallthru
          _
        %s311 = sand.u32 %s45, 1
        %s312 = scalar_lea.sflag [#allocation7], %s311
        %s313 = sand.u32 %s45, 1
        %s314 = smul.addr %s313, 4
        %s315 = scalar_lea.vmem [#allocation6], %s314
        %p316 = pneg %p58
        %p317 = pneg %p55
        %p318 = pneg %p79
        %p319 = pneg %p76
        %p320 = pneg %p100
        %p321 = pneg %p97
        %p322 = pneg %p121
        %p323 = pneg %p118
        %p324 = pneg %p142
        %p325 = pneg %p139
        %p326 = pneg %p163
        %p327 = pneg %p160
        %p328 = pneg %p184
        %p329 = pneg %p181
        %p330 = pneg %p212
        %p331 = pneg %p209
        %s332 = sand.u32 %s199, 1
        %s333 = scalar_lea.sflag [#allocation8], %s332
        %s334 = sand.u32 %s199, 1
        %s335 = smul.addr %s334, 8
        %s336 = scalar_lea.vmem [#allocation12], %s335
        %p338 = scmp.eq.s32.totalorder %s30, 0
        // Predicated region
        $region61: #{tpu_custom_call.1} parent=47 // pred_check
          %p339 = pneg %p338
        $region62: #{tpu_custom_call.1} parent=47 // pred_check_branch
          %341 = sbr.rel (%p339) target = $region64
        $region63: #{tpu_custom_call.1} parent=47 // pred_region
          %v342 = vld [vmem:[%s298] sm:$0xf]
          %v343 = vld [vmem:[#allocation11] sm:$0xf]
          %v344 = vld [vmem:[#allocation11 + $0x4] sm:$0xf]
          %v345 = vld [vmem:[#allocation11 + $0x8] sm:$0xf]
          %v346 = vld [vmem:[#allocation11 + $0xc] sm:$0xf]
          %v347 = vld [vmem:[%s4] sm:$0x1]
          %v349 = vlaneseq
          %v350 = vshrl.u32 %v349, 7
          %v351 = vsub.s32 0, %v350
          %v352 = vrot.slane %v347, %v351
          %v358 = vunpack.c.l.b16 %v343
          %v359 = vunpack.c.l.b16 %v344
          %v360 = vunpack.c.l.b16 %v345
          %v361 = vunpack.c.l.b16 %v346
          %v362 = vpack.c.b16 %v359, %v358
          %v363 = vpack.c.b16 %v361, %v360
          %vm366 = vcmask 261120
          %v368 = vsel %vm366, %v342, 0
          %370 = vmatprep.subr.bf16.mxu0 0
          %371 = vmatpush1.bf16.msra.mxu0 %v362
          %372 = vmatprep.subr.bf16.mxu0 0
          %373 = vmatpush1.bf16.msra.mxu0 %v363
          %374 = vmatprep.subr.bf16.mxu0 0
          %375 = vmatpush1.bf16.msra.mxu0 0
          %376 = vmatprep.subr.bf16.mxu0 0
          %377 = vmatpush1.bf16.msra.mxu0 0
          %378 = vmatprep.subr.bf16.mxu0 0
          %379 = vmatpush1.bf16.msra.mxu0 0
          %380 = vmatprep.subr.bf16.mxu0 0
          %381 = vmatpush1.bf16.msra.mxu0 0
          %382 = vmatprep.subr.bf16.mxu0 0
          %383 = vmatpush1.bf16.msra.mxu0 0
          %384 = vmatprep.subr.bf16.mxu0 0
          %385 = vmatpush1.bf16.msra.mxu0 0
          %386 = vmatprep.subr.bf16.mxu0 0
          %387 = vmatpush1.bf16.msra.mxu0 0
          %388 = vmatprep.subr.bf16.mxu0 0
          %389 = vmatpush1.bf16.msra.mxu0 0
          %390 = vmatprep.subr.bf16.mxu0 0
          %391 = vmatpush1.bf16.msra.mxu0 0
          %392 = vmatprep.subr.bf16.mxu0 0
          %393 = vmatpush1.bf16.msra.mxu0 0
          %394 = vmatprep.subr.bf16.mxu0 0
          %395 = vmatpush1.bf16.msra.mxu0 0
          %396 = vmatprep.subr.bf16.mxu0 0
          %397 = vmatpush1.bf16.msra.mxu0 0
          %398 = vmatprep.subr.bf16.mxu0 0
          %399 = vmatpush1.bf16.msra.mxu0 0
          %400 = vmatprep.subr.bf16.mxu0 0
          %401 = vmatpush1.bf16.msra.mxu0 0
          %402 = vmatprep.mubr.bf16.mxu0 0
          %403 = vmatmul.mubr.bf16.gmra.mrb[0].mxu0 %v368
          %v404 = vpop.f32.mrb[0].mxu0
          %v405 = vadd.f32 %v352, %v404
          %v406 = vpop.f32.mrb[0].mxu0
          %v407 = vpop.f32.mrb[0].mxu0
          %v408 = vpop.f32.mrb[0].mxu0
          %409 = vdwg.mxu0
          %v410 = vpack.c.bf16 %v405, %v405
          %vm411 = vcmask 257024
          %412 = vst.msk [vmem:[#allocation2] sm:$0xf] %vm411, %v410
          %v414 = vunpack.c.l.b16 %v410
          %v415 = vpack.c.b16 %v414, %v414
          %416 = vrot.lane.b32.xlu0 %v415, 96
          %v417 = vpop.permute.xlu0 %416
          %419 = vst.msk [vmem:[#allocation3] sm:$0xf] %vm411, %v417
        $region64: #{tpu_custom_call.1} parent=47 // pred_fallthru
          _
        %s420 = smul.u32 %s30, 8
        %s421 = sshra.s32 %s420, 3
        %s422 = sand.u32 %s420, 7
        %s423 = smul.addr %s421, 4
        %s424 = scalar_lea.vmem %s298, %s423 [#allocation6]
        %v425 = vld [vmem:[%s424] sm:$0xf]
        %vm426 = vcmask 257024
        %427 = vst.msk [vmem:[#allocation4] sm:$0xf] %vm426, %v425
        %vm428 = vcmask 261120
        %429 = vst.msk [vmem:[#allocation5] sm:$0xff] %vm428, 0.0
        %v430 = vld [vmem:[#allocation4] sm:$0xf]
        %v431 = vld [vmem:[#allocation9] sm:$0xf]
        %v432 = vld [vmem:[#allocation9 + $0x4] sm:$0xf]
        %v433 = vld [vmem:[#allocation9 + $0x8] sm:$0xf]
        %v434 = vld [vmem:[#allocation9 + $0xc] sm:$0xf]
        %v435 = vld [vmem:[%s2] sm:$0x1]
        %v437 = vlaneseq
        %v438 = vshrl.u32 %v437, 7
        %v439 = vsub.s32 0, %v438
        %v440 = vrot.slane %v435, %v439
        %v446 = vunpack.c.l.b16 %v431
        %v447 = vunpack.c.l.b16 %v432
        %v448 = vunpack.c.l.b16 %v433
        %v449 = vunpack.c.l.b16 %v434
        %v450 = vpack.c.b16 %v447, %v446
        %v451 = vpack.c.b16 %v449, %v448
        %v455 = vsel %vm428, %v430, 0
        %457 = vmatprep.subr.bf16.mxu0 0
        %458 = vmatpush1.bf16.msra.mxu0 %v450
        %459 = vmatprep.subr.bf16.mxu0 0
        %460 = vmatpush1.bf16.msra.mxu0 %v451
        %461 = vmatprep.subr.bf16.mxu0 0
        %462 = vmatpush1.bf16.msra.mxu0 0
        %463 = vmatprep.subr.bf16.mxu0 0
        %464 = vmatpush1.bf16.msra.mxu0 0
        %465 = vmatprep.subr.bf16.mxu0 0
        %466 = vmatpush1.bf16.msra.mxu0 0
        %467 = vmatprep.subr.bf16.mxu0 0
        %468 = vmatpush1.bf16.msra.mxu0 0
        %469 = vmatprep.subr.bf16.mxu0 0
        %470 = vmatpush1.bf16.msra.mxu0 0
        %471 = vmatprep.subr.bf16.mxu0 0
        %472 = vmatpush1.bf16.msra.mxu0 0
        %473 = vmatprep.subr.bf16.mxu0 0
        %474 = vmatpush1.bf16.msra.mxu0 0
        %475 = vmatprep.subr.bf16.mxu0 0
        %476 = vmatpush1.bf16.msra.mxu0 0
        %477 = vmatprep.subr.bf16.mxu0 0
        %478 = vmatpush1.bf16.msra.mxu0 0
        %479 = vmatprep.subr.bf16.mxu0 0
        %480 = vmatpush1.bf16.msra.mxu0 0
        %481 = vmatprep.subr.bf16.mxu0 0
        %482 = vmatpush1.bf16.msra.mxu0 0
        %483 = vmatprep.subr.bf16.mxu0 0
        %484 = vmatpush1.bf16.msra.mxu0 0
        %485 = vmatprep.subr.bf16.mxu0 0
        %486 = vmatpush1.bf16.msra.mxu0 0
        %487 = vmatprep.subr.bf16.mxu0 0
        %488 = vmatpush1.bf16.msra.mxu0 0
        %489 = vmatprep.mubr.bf16.mxu0 0
        %490 = vmatmul.mubr.bf16.gmra.mrb[0].mxu0 %v455
        %v491 = vpop.f32.mrb[0].mxu0
        %v492 = vadd.f32 %v440, %v491
        %v493 = vpop.f32.mrb[0].mxu0
        %v494 = vpop.f32.mrb[0].mxu0
        %v495 = vpop.f32.mrb[0].mxu0
        %496 = vdwg.mxu0
        %v497 = vld [vmem:[#allocation2] sm:$0xf]
        %v498 = vld [vmem:[#allocation3] sm:$0xf]
        %v499 = vpack.c.bf16 %v492, %v492
        %vm500 = vcmask 130048
        %v502 = vsel %vm500, %v499, 0
        %v505 = vsel %vm500, %v497, 0
        %507 = vmatprep.subr.bf16.mxu0 0
        %508 = vmatpush1.bf16.xpose.msra.mxu0 %v505
        %509 = vmatprep.subr.bf16.mxu0 0
        %510 = vmatpush1.bf16.xpose.msra.mxu0 0
        %511 = vmatprep.subr.bf16.mxu0 0
        %512 = vmatpush1.bf16.xpose.msra.mxu0 0
        %513 = vmatprep.subr.bf16.mxu0 0
        %514 = vmatpush1.bf16.xpose.msra.mxu0 0
        %515 = vmatprep.subr.bf16.mxu0 0
        %516 = vmatpush1.bf16.xpose.msra.mxu0 0
        %517 = vmatprep.subr.bf16.mxu0 0
        %518 = vmatpush1.bf16.xpose.msra.mxu0 0
        %519 = vmatprep.subr.bf16.mxu0 0
        %520 = vmatpush1.bf16.xpose.msra.mxu0 0
        %521 = vmatprep.subr.bf16.mxu0 0
        %522 = vmatpush1.bf16.xpose.msra.mxu0 0
        %523 = vmatprep.subr.bf16.mxu0 0
        %524 = vmatpush1.bf16.xpose.msra.mxu0 0
        %525 = vmatprep.subr.bf16.mxu0 0
        %526 = vmatpush1.bf16.xpose.msra.mxu0 0
        %527 = vmatprep.subr.bf16.mxu0 0
        %528 = vmatpush1.bf16.xpose.msra.mxu0 0
        %529 = vmatprep.subr.bf16.mxu0 0
        %530 = vmatpush1.bf16.xpose.msra.mxu0 0
        %531 = vmatprep.subr.bf16.mxu0 0
        %532 = vmatpush1.bf16.xpose.msra.mxu0 0
        %533 = vmatprep.subr.bf16.mxu0 0
        %534 = vmatpush1.bf16.xpose.msra.mxu0 0
        %535 = vmatprep.subr.bf16.mxu0 0
        %536 = vmatpush1.bf16.xpose.msra.mxu0 0
        %537 = vmatprep.subr.bf16.mxu0 0
        %538 = vmatpush1.bf16.xpose.msra.mxu0 0
        %539 = vmatprep.mubr.bf16.mxu0 0
        %540 = vmatmul.mubr.bf16.gmra.mrb[0].mxu0 %v502
        %v541 = vpop.f32.mrb[0].mxu0
        %v542 = vadd.f32 0.0, %v541
        %v543 = vpop.f32.mrb[0].mxu0
        %v544 = vpop.f32.mrb[0].mxu0
        %v545 = vpop.f32.mrb[0].mxu0
        %546 = vdwg.mxu0
        %vm547 = vcmask 64512
        %v548 = vsel %vm547, %v542, -inf
        %549 = vmax.xlane.f32.xlu0 %v548
        %v550 = vpop.xlane.xlu0 %549
        %v551 = vsub.f32 %v542, %v550
        %v552 = vmul.f32 %v551, 1.442695
        %v553 = vpow.pop %v552
        %v554 = vsel %vm547, %v553, 0.0
        %555 = vadd.xlane.f32.xlu0 %v554
        %v556 = vpop.xlane.xlu0 %555
        %v557 = vrcp.pop %v556
        %v558 = vmul.f32 %v553, %v557
        %v559 = vpack.c.bf16 %v558, %v558
        %v561 = vsel %vm547, %v559, 0
        %vm563 = vcmask 1043456
        %v565 = vsel %vm563, %v498, 0
        %567 = vmatprep.subr.bf16.mxu0 0
        %568 = vmatpush1.bf16.msra.mxu0 %v565
        %569 = vmatprep.subr.bf16.mxu0 0
        %570 = vmatpush1.bf16.msra.mxu0 0
        %571 = vmatprep.subr.bf16.mxu0 0
        %572 = vmatpush1.bf16.msra.mxu0 0
        %573 = vmatprep.subr.bf16.mxu0 0
        %574 = vmatpush1.bf16.msra.mxu0 0
        %575 = vmatprep.subr.bf16.mxu0 0
        %576 = vmatpush1.bf16.msra.mxu0 0
        %577 = vmatprep.subr.bf16.mxu0 0
        %578 = vmatpush1.bf16.msra.mxu0 0
        %579 = vmatprep.subr.bf16.mxu0 0
        %580 = vmatpush1.bf16.msra.mxu0 0
        %581 = vmatprep.subr.bf16.mxu0 0
        %582 = vmatpush1.bf16.msra.mxu0 0
        %583 = vmatprep.subr.bf16.mxu0 0
        %584 = vmatpush1.bf16.msra.mxu0 0
        %585 = vmatprep.subr.bf16.mxu0 0
        %586 = vmatpush1.bf16.msra.mxu0 0
        %587 = vmatprep.subr.bf16.mxu0 0
        %588 = vmatpush1.bf16.msra.mxu0 0
        %589 = vmatprep.subr.bf16.mxu0 0
        %590 = vmatpush1.bf16.msra.mxu0 0
        %591 = vmatprep.subr.bf16.mxu0 0
        %592 = vmatpush1.bf16.msra.mxu0 0
        %593 = vmatprep.subr.bf16.mxu0 0
        %594 = vmatpush1.bf16.msra.mxu0 0
        %595 = vmatprep.subr.bf16.mxu0 0
        %596 = vmatpush1.bf16.msra.mxu0 0
        %597 = vmatprep.subr.bf16.mxu0 0
        %598 = vmatpush1.bf16.msra.mxu0 0
        %599 = vmatprep.mubr.bf16.mxu0 0
        %600 = vmatmul.mubr.bf16.gmra.mrb[0].mxu0 %v561
        %v601 = vpop.f32.mrb[0].mxu0
        %v602 = vadd.f32 0.0, %v601
        %v603 = vpop.f32.mrb[0].mxu0
        %v604 = vpop.f32.mrb[0].mxu0
        %v605 = vpop.f32.mrb[0].mxu0
        %606 = vdwg.mxu0
        %608 = vrot.lane.b32.xlu0 %v499, 112
        %v609 = vpop.permute.xlu0 %608
        %v611 = vunpack.c.l.b16 %v497
        %v612 = vpack.c.b16 %v611, %v611
        %613 = vrot.lane.b32.xlu0 %v612, 112
        %v614 = vpop.permute.xlu0 %613
        %v616 = vsel %vm500, %v609, 0
        %v619 = vsel %vm500, %v614, 0
        %621 = vmatprep.subr.bf16.mxu0 0
        %622 = vmatpush1.bf16.xpose.msra.mxu0 %v619
        %623 = vmatprep.subr.bf16.mxu0 0
        %624 = vmatpush1.bf16.xpose.msra.mxu0 0
        %625 = vmatprep.subr.bf16.mxu0 0
        %626 = vmatpush1.bf16.xpose.msra.mxu0 0
        %627 = vmatprep.subr.bf16.mxu0 0
        %628 = vmatpush1.bf16.xpose.msra.mxu0 0
        %629 = vmatprep.subr.bf16.mxu0 0
        %630 = vmatpush1.bf16.xpose.msra.mxu0 0
        %631 = vmatprep.subr.bf16.mxu0 0
        %632 = vmatpush1.bf16.xpose.msra.mxu0 0
        %633 = vmatprep.subr.bf16.mxu0 0
        %634 = vmatpush1.bf16.xpose.msra.mxu0 0
        %635 = vmatprep.subr.bf16.mxu0 0
        %636 = vmatpush1.bf16.xpose.msra.mxu0 0
        %637 = vmatprep.subr.bf16.mxu0 0
        %638 = vmatpush1.bf16.xpose.msra.mxu0 0
        %639 = vmatprep.subr.bf16.mxu0 0
        %640 = vmatpush1.bf16.xpose.msra.mxu0 0
        %641 = vmatprep.subr.bf16.mxu0 0
        %642 = vmatpush1.bf16.xpose.msra.mxu0 0
        %643 = vmatprep.subr.bf16.mxu0 0
        %644 = vmatpush1.bf16.xpose.msra.mxu0 0
        %645 = vmatprep.subr.bf16.mxu0 0
        %646 = vmatpush1.bf16.xpose.msra.mxu0 0
        %647 = vmatprep.subr.bf16.mxu0 0
        %648 = vmatpush1.bf16.xpose.msra.mxu0 0
        %649 = vmatprep.subr.bf16.mxu0 0
        %650 = vmatpush1.bf16.xpose.msra.mxu0 0
        %651 = vmatprep.subr.bf16.mxu0 0
        %652 = vmatpush1.bf16.xpose.msra.mxu0 0
        %653 = vmatprep.mubr.bf16.mxu0 0
        %654 = vmatmul.mubr.bf16.gmra.mrb[0].mxu0 %v616
        %v655 = vpop.f32.mrb[0].mxu0
        %v656 = vadd.f32 0.0, %v655
        %v657 = vpop.f32.mrb[0].mxu0
        %v658 = vpop.f32.mrb[0].mxu0
        %v659 = vpop.f32.mrb[0].mxu0
        %660 = vdwg.mxu0
        %v661 = vsel %vm547, %v656, -inf
        %662 = vmax.xlane.f32.xlu0 %v661
        %v663 = vpop.xlane.xlu0 %662
        %v664 = vsub.f32 %v656, %v663
        %v665 = vmul.f32 %v664, 1.442695
        %v666 = vpow.pop %v665
        %v667 = vsel %vm547, %v666, 0.0
        %668 = vadd.xlane.f32.xlu0 %v667
        %v669 = vpop.xlane.xlu0 %668
        %v670 = vrcp.pop %v669
        %v671 = vmul.f32 %v666, %v670
        %v672 = vpack.c.bf16 %v671, %v671
        %v674 = vunpack.c.l.b16 %v498
        %v675 = vpack.c.b16 %v674, %v674
        %676 = vrot.lane.b32.xlu0 %v675, 112
        %v677 = vpop.permute.xlu0 %676
        %v679 = vsel %vm547, %v672, 0
        %v682 = vsel %vm563, %v677, 0
        %684 = vmatprep.subr.bf16.mxu0 0
        %685 = vmatpush1.bf16.msra.mxu0 %v682
        %686 = vmatprep.subr.bf16.mxu0 0
        %687 = vmatpush1.bf16.msra.mxu0 0
        %688 = vmatprep.subr.bf16.mxu0 0
        %689 = vmatpush1.bf16.msra.mxu0 0
        %690 = vmatprep.subr.bf16.mxu0 0
        %691 = vmatpush1.bf16.msra.mxu0 0
        %692 = vmatprep.subr.bf16.mxu0 0
        %693 = vmatpush1.bf16.msra.mxu0 0
        %694 = vmatprep.subr.bf16.mxu0 0
        %695 = vmatpush1.bf16.msra.mxu0 0
        %696 = vmatprep.subr.bf16.mxu0 0
        %697 = vmatpush1.bf16.msra.mxu0 0
        %698 = vmatprep.subr.bf16.mxu0 0
        %699 = vmatpush1.bf16.msra.mxu0 0
        %700 = vmatprep.subr.bf16.mxu0 0
        %701 = vmatpush1.bf16.msra.mxu0 0
        %702 = vmatprep.subr.bf16.mxu0 0
        %703 = vmatpush1.bf16.msra.mxu0 0
        %704 = vmatprep.subr.bf16.mxu0 0
        %705 = vmatpush1.bf16.msra.mxu0 0
        %706 = vmatprep.subr.bf16.mxu0 0
        %707 = vmatpush1.bf16.msra.mxu0 0
        %708 = vmatprep.subr.bf16.mxu0 0
        %709 = vmatpush1.bf16.msra.mxu0 0
        %710 = vmatprep.subr.bf16.mxu0 0
        %711 = vmatpush1.bf16.msra.mxu0 0
        %712 = vmatprep.subr.bf16.mxu0 0
        %713 = vmatpush1.bf16.msra.mxu0 0
        %714 = vmatprep.subr.bf16.mxu0 0
        %715 = vmatpush1.bf16.msra.mxu0 0
        %716 = vmatprep.mubr.bf16.mxu0 0
        %717 = vmatmul.mubr.bf16.gmra.mrb[0].mxu0 %v679
        %v718 = vpop.f32.mrb[0].mxu0
        %v719 = vadd.f32 0.0, %v718
        %v720 = vpop.f32.mrb[0].mxu0
        %v721 = vpop.f32.mrb[0].mxu0
        %v722 = vpop.f32.mrb[0].mxu0
        %723 = vdwg.mxu0
        %725 = vrot.lane.b32.xlu0 %v719, 16
        %v726 = vpop.permute.xlu0 %725
        %v728 = vsel %vm500, %v602, %v726
        %v729 = vld [vmem:[#allocation5] sm:$0xff]
        %v730 = vpack.c.bf16 %v728, %v728
        %v731 = vld [vmem:[%s5] sm:$0xf]
        %v732 = vld [vmem:[%s5 + $0x4] sm:$0xf]
        %v733 = vld [vmem:[%s5 + $0x8] sm:$0xf]
        %v734 = vld [vmem:[%s5 + $0xc] sm:$0xf]
        %v739 = vunpack.c.l.b16 %v731
        %v740 = vunpack.c.l.b16 %v732
        %v741 = vunpack.c.l.b16 %v733
        %v742 = vunpack.c.l.b16 %v734
        %v743 = vpack.c.b16 %v740, %v739
        %v744 = vpack.c.b16 %v742, %v741
        %v748 = vsel %vm428, %v730, 0
        %750 = vmatprep.subr.bf16.mxu0 0
        %751 = vmatpush1.bf16.msra.mxu0 %v743
        %752 = vmatprep.subr.bf16.mxu0 0
        %753 = vmatpush1.bf16.msra.mxu0 %v744
        %754 = vmatprep.subr.bf16.mxu0 0
        %755 = vmatpush1.bf16.msra.mxu0 0
        %756 = vmatprep.subr.bf16.mxu0 0
        %757 = vmatpush1.bf16.msra.mxu0 0
        %758 = vmatprep.subr.bf16.mxu0 0
        %759 = vmatpush1.bf16.msra.mxu0 0
        %760 = vmatprep.subr.bf16.mxu0 0
        %761 = vmatpush1.bf16.msra.mxu0 0
        %762 = vmatprep.subr.bf16.mxu0 0
        %763 = vmatpush1.bf16.msra.mxu0 0
        %764 = vmatprep.subr.bf16.mxu0 0
        %765 = vmatpush1.bf16.msra.mxu0 0
        %766 = vmatprep.subr.bf16.mxu0 0
        %767 = vmatpush1.bf16.msra.mxu0 0
        %768 = vmatprep.subr.bf16.mxu0 0
        %769 = vmatpush1.bf16.msra.mxu0 0
        %770 = vmatprep.subr.bf16.mxu0 0
        %771 = vmatpush1.bf16.msra.mxu0 0
        %772 = vmatprep.subr.bf16.mxu0 0
        %773 = vmatpush1.bf16.msra.mxu0 0
        %774 = vmatprep.subr.bf16.mxu0 0
        %775 = vmatpush1.bf16.msra.mxu0 0
        %776 = vmatprep.subr.bf16.mxu0 0
        %777 = vmatpush1.bf16.msra.mxu0 0
        %778 = vmatprep.subr.bf16.mxu0 0
        %779 = vmatpush1.bf16.msra.mxu0 0
        %780 = vmatprep.subr.bf16.mxu0 0
        %781 = vmatpush1.bf16.msra.mxu0 0
        %782 = vmatprep.mubr.bf16.mxu0 0
        %783 = vmatmul.mubr.bf16.gmra.mrb[0].mxu0 %v748
        %v784 = vpop.f32.mrb[0].mxu0
        %v785 = vadd.f32 0.0, %v784
        %v786 = vpop.f32.mrb[0].mxu0
        %v787 = vpop.f32.mrb[0].mxu0
        %v788 = vpop.f32.mrb[0].mxu0
        %789 = vdwg.mxu0
        %v790 = vadd.f32 %v729, %v785
        %791 = vst.msk [vmem:[#allocation5] sm:$0xff] %vm428, %v790
        %v792 = vld [vmem:[#allocation5] sm:$0xff]
        %v793 = vld [vmem:[%s6] sm:$0x1]
        %v795 = vlaneseq
        %v796 = vshrl.u32 %v795, 7
        %v797 = vsub.s32 0, %v796
        %v798 = vrot.slane %v793, %v797
        %v800 = vadd.f32 %v792, %v798
        %801 = vst.msk [vmem:[%s336] sm:$0xff] %vm428, %v800
        %s802 = sand.u32 %s199, 1
        %s803 = scalar_lea.sflag [#allocation8], %s802
        %s804 = sand.u32 %s199, 1
        %s805 = smul.addr %s804, 8
        %s806 = scalar_lea.vmem [#allocation12], %s805
        // Predicated region
        $region65: #{tpu_custom_call.1} parent=47 // pred_check
          %p807 = pneg %p209
        $region66: #{tpu_custom_call.1} parent=47 // pred_check_branch
          %809 = sbr.rel (%p807) target = $region68
        $region67: #{tpu_custom_call.1} parent=47 // pred_region
          %s811 = ssub.s32 128, 128
          %812 = vsyncadd %s803, %s811
          %s813 = sadd.s32 %s30, %s29
          %s814 = smul.addr %s813, 128
          %s815 = scalar_lea.hbm %s7, %s814
          %s817 = sshll.u32 %s806, 4
          %s818 = int_to_ptr.vmem [resolvable:$true] %s817
          %820 = dma.vmem_to_hbm [thread:$0]  %s818, 128, %s815, %s803
        $region68: #{tpu_custom_call.1} parent=47 // pred_fallthru
          _
      $region48: #{tpu_custom_call.1} parent=5 // pred_fallthru
        _
      %p821 = scmp.le.s32.totalorder 2, %s20
      // Predicated region
      $region69: #{tpu_custom_call.1} parent=5 // pred_check
        %p822 = pneg %p821
      $region70: #{tpu_custom_call.1} parent=5 // pred_check_branch
        %824 = sbr.rel (%p822) target = $region72
      $region71: #{tpu_custom_call.1} parent=5 // pred_region
        %s825 = ssub.s32 %s20, 2
        // Predicated region
        $region73: #{tpu_custom_call.1} parent=71 // pred_check
          %p826 = pneg %p215
        $region74: #{tpu_custom_call.1} parent=71 // pred_check_branch
          %828 = sbr.rel (%p826) target = $region76
        $region75: #{tpu_custom_call.1} parent=71 // pred_region
          %s829 = sand.u32 %s200, 1
          %s830 = scalar_lea.sflag [#allocation8], %s829
          %s831 = sand.u32 %s200, 1
          %s832 = smul.addr %s831, 8
          %s833 = scalar_lea.vmem [#allocation12], %s832
          %834 = dma.done %s830, 128
        $region76: #{tpu_custom_call.1} parent=71 // pred_fallthru
          _
      $region72: #{tpu_custom_call.1} parent=5 // pred_fallthru
        _
    $region6: #{tpu_custom_call.1} parent=1 // loop_footer
      %s24 = sadd.s32 1, %s20
    $region7: #{tpu_custom_call.1} parent=1 // loop_footer_branch
      %19 = sbr.rel target = $region3
    $region8: #{tpu_custom_call.1} parent=1 // loop_exit
      _
    %835 = vsyncpa [#allocation7], 1
    %s836 = scalar_lea.sflag [#allocation7], 1
    %837 = vsyncpa %s836, 1
    %838 = vsyncpa [#allocation10], 1
    %839 = vsyncpa [#allocation8], 1
    %s840 = scalar_lea.sflag [#allocation8], 1
    %841 = vsyncpa %s840, 1

</llo_original>
